<compile_context>
chip_gen: v6e
topology: v6e:2x2x1
jax: 0.10.0
libtpu: 0.0.40
codegen_flags: <defaults>
</compile_context>

<pallas_src>
import functools

import jax
import jax.numpy as jnp
from jax.experimental import pallas as pl
from jax.experimental.pallas import tpu as pltpu


_DEFAULT_BLOCK_BYTES = 4 * 1024 * 1024   # target bytes per x block (all gens)


# --------------------------------------------------------------------------
# Kernels
# --------------------------------------------------------------------------
def _ca_batched_kernel(x_ref, w1t_ref, w2t_ref, o_ref, *, hw, nb):
    """One grid step = NB whole batch elements (small feature maps)."""
    # x_ref  : (NB, C, HW)   w1t_ref: (C, MID)   w2t_ref: (MID, C)
    # o_ref  : (NB, 1, C)
    x = x_ref[...]
    avg = jnp.sum(x, axis=2, dtype=jnp.float32) * (1.0 / hw)        # (NB, C)
    mx = jnp.max(x, axis=2).astype(jnp.float32)                     # (NB, C)

    # Fused FC: fc(avg)+fc(max) == (relu(avg@w1t) + relu(mx@w1t)) @ w2t
    h = (jnp.maximum(jnp.dot(avg, w1t_ref[...],
                             preferred_element_type=jnp.float32), 0.0)
         + jnp.maximum(jnp.dot(mx, w1t_ref[...],
                               preferred_element_type=jnp.float32), 0.0))     # (NB, MID)
    out = jnp.dot(h, w2t_ref[...], preferred_element_type=jnp.float32)        # (NB, C)
    sig = jax.nn.sigmoid(out).astype(o_ref.dtype)

    # Lane-dense (1, C) row stores; nb is a small static constant, so this
    # unrolls into nb cheap epilogue stores (ragged trailing rows of the last
    # batch block are clipped by Pallas on writeback).
    for b in range(nb):
        o_ref[b] = sig[b:b + 1, :]


def _ca_spatial_kernel(x_ref, w1_ref, w2t_ref, o_ref, sum_sc, max_sc,
                       *, hw, thw, rem):
    """grid = (batch, spatial tiles); running sum/max kept in VMEM scratch."""
    # x_ref  : (C, THW)    w1_ref : (MID, C)    w2t_ref: (MID, C)
    # o_ref  : (1, 1, C)   sum_sc/max_sc: (C, 1) f32
    k = pl.program_id(1)
    nk = pl.num_programs(1)

    @pl.when(k == 0)
    def _init():
        sum_sc[...] = jnp.zeros(sum_sc.shape, jnp.float32)
        max_sc[...] = jnp.full(max_sc.shape, -jnp.inf, jnp.float32)

    x = x_ref[...]                                                  # (C, THW)

    def _accumulate(x_sum_in, x_max_in):
        sum_sc[...] += jnp.sum(x_sum_in, axis=1, keepdims=True, dtype=jnp.float32)
        max_sc[...] = jnp.maximum(
            max_sc[...], jnp.max(x_max_in, axis=1, keepdims=True).astype(jnp.float32))

    if rem == thw:
        # HW divides evenly: every tile is full, no masking anywhere.
        _accumulate(x, x)
    else:
        # Ragged last tile (no wrapper pad): its trailing lanes are undefined,
        # so mask BOTH sum and max — but only on that tile.
        @pl.when(k < nk - 1)
        def _full_tile():
            _accumulate(x, x)

        @pl.when(k == nk - 1)
        def _ragged_tile():
            lane = jax.lax.broadcasted_iota(jnp.int32, (1, thw), 1)
            valid = lane < rem
            x_sum_in = jnp.where(valid, x, jnp.asarray(0, dtype=x.dtype))
            x_max_in = jnp.where(valid, x, jnp.asarray(-jnp.inf, dtype=x.dtype))
            _accumulate(x_sum_in, x_max_in)

    @pl.when(k == nk - 1)
    def _finalize():
        avg_col = sum_sc[...] * (1.0 / hw)                          # (C, 1)
        # Fused FC: shared second projection over relu(w1@avg) + relu(w1@max).
        hsum = (jnp.maximum(jnp.dot(w1_ref[...], avg_col,
                                    preferred_element_type=jnp.float32), 0.0)
                + jnp.maximum(jnp.dot(w1_ref[...], max_sc[...],
                                      preferred_element_type=jnp.float32), 0.0))  # (MID, 1)
        # Lane-dense (1, C) result without any in-kernel transpose:
        # broadcast-multiply the (MID, 1) column against w2^T and reduce
        # over sublanes (cheaper and simpler than the old diag relayout).
        out = jnp.sum(hsum * w2t_ref[...].astype(jnp.float32),
                      axis=0, keepdims=True)                        # (1, C)
        o_ref[0] = jax.nn.sigmoid(out).astype(o_ref.dtype)


# --------------------------------------------------------------------------
# Wrapper
# --------------------------------------------------------------------------
def _pick_spatial_tile(hw, c, itemsize, spatial_tile):
    """Spatial tile length (multiple of 128) targeting the block budget."""
    if spatial_tile is None:
        spatial_tile = (_DEFAULT_BLOCK_BYTES // (c * itemsize)) // 128 * 128
    else:
        spatial_tile = (spatial_tile // 128) * 128
    return max(128, spatial_tile)


def _vmem_limit_bytes(x_block_bytes):
    # Double-buffered x blocks (+ tiny weights/output/scratch) with margin;
    # never below the most permissive default, comfortably below v7x physical.
    need = 3 * x_block_bytes + (4 << 20)
    return int(min(max(need, 32 << 20), 56 << 20))


@functools.partial(jax.jit, static_argnames=("spatial_tile",))
def channel_attention(x, w1, w2, *, spatial_tile=None):
    """x: (N, C, H, W) NCHW; w1: (C//r, C); w2: (C, C//r). Returns (N, C, 1, 1)."""
    n, c, h, w = x.shape
    mid = w1.shape[0]
    hw = h * w
    itemsize = x.dtype.itemsize

    x_flat = x.reshape(n, c, hw)
    w2t = jnp.transpose(w2)                       # (MID, C), once outside kernel
    thw = _pick_spatial_tile(hw, c, itemsize, spatial_tile)

    if hw <= thw:
        # ---- batched path: whole feature map per element, NB elements / step.
        per_elem = c * hw * itemsize
        nb = max(1, min(n, _DEFAULT_BLOCK_BYTES // max(per_elem, 1), 256))
        if n > 1:
            # Keep >=2 grid steps so the "parallel" axis can use both cores.
            nb = min(nb, -(-n // 2))
        n_blocks = -(-n // nb)
        x_block_bytes = nb * per_elem
        w1t = jnp.transpose(w1)                   # (C, MID)

        kernel = functools.partial(_ca_batched_kernel, hw=hw, nb=nb)
        out = pl.pallas_call(
            kernel,
            out_shape=jax.ShapeDtypeStruct((n, 1, c), x.dtype),
            grid_spec=pltpu.PrefetchScalarGridSpec(
                num_scalar_prefetch=0,
                grid=(n_blocks,),
                in_specs=[
                    pl.BlockSpec((nb, c, hw), lambda i: (i, 0, 0)),
                    pl.BlockSpec((c, mid), lambda i: (0, 0)),
                    pl.BlockSpec((mid, c), lambda i: (0, 0)),
                ],
                out_specs=pl.BlockSpec((nb, 1, c), lambda i: (i, 0, 0)),
            ),
            compiler_params=pltpu.CompilerParams(
                dimension_semantics=("parallel",),
                vmem_limit_bytes=_vmem_limit_bytes(x_block_bytes)),
        )(x_flat, w1t, w2t)
    else:
        # ---- spatial path: tile HW (ragged last tile, no pad), scratch accum.
        n_k = -(-hw // thw)
        rem = hw - (n_k - 1) * thw
        x_block_bytes = c * thw * itemsize

        kernel = functools.partial(_ca_spatial_kernel, hw=hw, thw=thw, rem=rem)
        out = pl.pallas_call(
            kernel,
            out_shape=jax.ShapeDtypeStruct((n, 1, c), x.dtype),
            grid_spec=pltpu.PrefetchScalarGridSpec(
                num_scalar_prefetch=0,
                grid=(n, n_k),
                in_specs=[
                    pl.BlockSpec((None, c, thw), lambda i, k: (i, 0, k)),
                    pl.BlockSpec((mid, c), lambda i, k: (0, 0)),
                    pl.BlockSpec((mid, c), lambda i, k: (0, 0)),
                ],
                out_specs=pl.BlockSpec((1, 1, c), lambda i, k: (i, 0, 0)),
                scratch_shapes=[
                    pltpu.VMEM((c, 1), jnp.float32),   # running spatial sum
                    pltpu.VMEM((c, 1), jnp.float32),   # running spatial max
                ],
            ),
            compiler_params=pltpu.CompilerParams(
                dimension_semantics=("parallel", "arbitrary"),
                vmem_limit_bytes=_vmem_limit_bytes(x_block_bytes)),
        )(x_flat, w1, w2t)

    return out.reshape(n, c, 1, 1)


# --------------------------------------------------------------------------
# Reference + test driver
# --------------------------------------------------------------------------
def _reference(x, w1, w2):
    avg = jnp.mean(x, axis=(2, 3))                 # (N, C)
    mx = jnp.max(x, axis=(2, 3))                   # (N, C)

    def fc(p):
        return jnp.maximum(p @ w1.T, 0.0) @ w2.T

    return jax.nn.sigmoid(fc(avg) + fc(mx))[:, :, None, None]


if __name__ == "__main__":
    root = jax.random.PRNGKey(0)

    def run_case(case_id, n, c, h, w, ratio, spatial_tile):
        mid = c // ratio
        kx, k1, k2 = jax.random.split(jax.random.fold_in(root, case_id), 3)
        x = jax.random.normal(kx, (n, c, h, w), dtype=jnp.float32)
        # "Conv2d 1x1, bias=False" weights with the kernel dims squeezed.
        w1 = jax.random.normal(k1, (mid, c), dtype=jnp.float32) * 0.1
        w2 = jax.random.normal(k2, (c, mid), dtype=jnp.float32) * 0.1

        out = jax.block_until_ready(
            channel_attention(x, w1, w2, spatial_tile=spatial_tile))
        ref = _reference(x, w1, w2)
        assert out.shape == (n, c, 1, 1)
        assert jnp.allclose(out, ref, atol=1e-5, rtol=1e-5), f"mismatch in case {case_id}"

    # in_planes=64, ratio=16 -> mid=4 (module defaults).
    run_case(0, 2, 64, 16, 16, 16, None)   # batched path, one element / step
    run_case(1, 3, 64, 16, 16, 16, 128)    # spatial path, even tiles (no masking)
    run_case(2, 2, 64, 12, 12, 16, 128)    # spatial path, ragged last tile (masked sum+max)
    run_case(3, 5, 64, 8, 8, 16, None)     # batched path, NB>1 + ragged last batch block

    print("KERNEL_OK")
</pallas_src>

<mosaic_0001>
module attributes {stable_mosaic.version = 11 : i64} {
  func.func @_ca_batched_kernel(%arg0: i32, %arg1: memref<1x64x256xf32, #tpu.memory_space<vmem>>, %arg2: memref<64x4xf32, #tpu.memory_space<vmem>>, %arg3: memref<4x64xf32, #tpu.memory_space<vmem>>, %arg4: memref<1x1x64xf32, #tpu.memory_space<vmem>>) attributes {dimension_semantics = [#tpu.dimension_semantics<parallel>], iteration_bounds = array<i64: 2>, scalar_prefetch = 0 : i64, scratch_operands = 0 : i64, tpu.core_type = #tpu.core_type<tc>, window_params = [{transform_indices = @transform_0, window_bounds = array<i64: 1, 64, 256>}, {pipeline_mode = #tpu.pipeline_mode<synchronous>, transform_indices = @transform_1, window_bounds = array<i64: 64, 4>}, {pipeline_mode = #tpu.pipeline_mode<synchronous>, transform_indices = @transform_2, window_bounds = array<i64: 4, 64>}, {transform_indices = @transform_3, window_bounds = array<i64: 1, 1, 64>}]} {
    %c0 = arith.constant 0 : index
    %c0_0 = arith.constant 0 : index
    %c0_1 = arith.constant 0 : index
    %0 = vector.load %arg1[%c0, %c0_0, %c0_1] : memref<1x64x256xf32, #tpu.memory_space<vmem>>, vector<1x64x256xf32>
    %cst = arith.constant dense<0.000000e+00> : vector<1x64xf32>
    %1 = vector.multi_reduction <add>, %0, %cst [2] : vector<1x64x256xf32> to vector<1x64xf32>
    %cst_2 = arith.constant 3.906250e-03 : f32
    %2 = vector.broadcast %cst_2 : f32 to vector<1x64xf32>
    %3 = arith.mulf %1, %2 : vector<1x64xf32>
    %cst_3 = arith.constant dense<0xFF800000> : vector<1x64xf32>
    %4 = vector.multi_reduction <maximumf>, %0, %cst_3 [2] : vector<1x64x256xf32> to vector<1x64xf32>
    %c0_4 = arith.constant 0 : index
    %c0_5 = arith.constant 0 : index
    %5 = vector.load %arg2[%c0_4, %c0_5] : memref<64x4xf32, #tpu.memory_space<vmem>>, vector<64x4xf32>
    %cst_6 = arith.constant dense<0.000000e+00> : vector<1x4xf32>
    %6 = tpu.matmul %3, %5, %cst_6 {dimension_numbers = #tpu.dot_dimension_numbers<[1], [0], [0], [1], [0, 0, 1, 1], [], []>} : vector<1x64xf32>, vector<64x4xf32>, vector<1x4xf32> -> vector<1x4xf32>
    %cst_7 = arith.constant 0.000000e+00 : f32
    %7 = vector.broadcast %cst_7 : f32 to vector<1x4xf32>
    %8 = arith.maximumf %6, %7 : vector<1x4xf32>
    %c0_8 = arith.constant 0 : index
    %c0_9 = arith.constant 0 : index
    %9 = vector.load %arg2[%c0_8, %c0_9] : memref<64x4xf32, #tpu.memory_space<vmem>>, vector<64x4xf32>
    %cst_10 = arith.constant dense<0.000000e+00> : vector<1x4xf32>
    %10 = tpu.matmul %4, %9, %cst_10 {dimension_numbers = #tpu.dot_dimension_numbers<[1], [0], [0], [1], [0, 0, 1, 1], [], []>} : vector<1x64xf32>, vector<64x4xf32>, vector<1x4xf32> -> vector<1x4xf32>
    %cst_11 = arith.constant 0.000000e+00 : f32
    %11 = vector.broadcast %cst_11 : f32 to vector<1x4xf32>
    %12 = arith.maximumf %10, %11 : vector<1x4xf32>
    %13 = arith.addf %8, %12 : vector<1x4xf32>
    %c0_12 = arith.constant 0 : index
    %c0_13 = arith.constant 0 : index
    %14 = vector.load %arg3[%c0_12, %c0_13] : memref<4x64xf32, #tpu.memory_space<vmem>>, vector<4x64xf32>
    %cst_14 = arith.constant dense<0.000000e+00> : vector<1x64xf32>
    %15 = tpu.matmul %13, %14, %cst_14 {dimension_numbers = #tpu.dot_dimension_numbers<[1], [0], [0], [1], [0, 0, 1, 1], [], []>} : vector<1x4xf32>, vector<4x64xf32>, vector<1x64xf32> -> vector<1x64xf32>
    %16 = arith.negf %15 : vector<1x64xf32>
    %17 = math.exp %16 : vector<1x64xf32>
    %cst_15 = arith.constant 1.000000e+00 : f32
    %18 = vector.broadcast %cst_15 : f32 to vector<1x64xf32>
    %19 = arith.addf %18, %17 : vector<1x64xf32>
    %20 = arith.divf %18, %19 : vector<1x64xf32>
    %c0_16 = arith.constant 0 : index
    %c0_17 = arith.constant 0 : index
    %c0_18 = arith.constant 0 : index
    %21 = vector.load %arg4[%c0_16, %c0_17, %c0_18] : memref<1x1x64xf32, #tpu.memory_space<vmem>>, vector<1x1x64xf32>
    %22 = vector.shape_cast %21 : vector<1x1x64xf32> to vector<1x64xf32>
    %23 = vector.shape_cast %20 : vector<1x64xf32> to vector<1x1x64xf32>
    tpu.vector_store %arg4[%c0_16, %c0_17, %c0_18], %23 {strides = array<i32>} : memref<1x1x64xf32, #tpu.memory_space<vmem>>, vector<1x1x64xf32>,
    return
  }
  func.func @transform_0(%arg0: i32) -> (i32, i32, i32) {
    %c0_i32 = arith.constant 0 : i32
    %c0_i32_0 = arith.constant 0 : i32
    %c0_i32_1 = arith.constant 0 : i32
    return %arg0, %c0_i32, %c0_i32_0 : i32, i32, i32
  }
  func.func @transform_1(%arg0: i32) -> (i32, i32) {
    %c0_i32 = arith.constant 0 : i32
    %c0_i32_0 = arith.constant 0 : i32
    %c0_i32_1 = arith.constant 0 : i32
    return %c0_i32, %c0_i32_0 : i32, i32
  }
  func.func @transform_2(%arg0: i32) -> (i32, i32) {
    %c0_i32 = arith.constant 0 : i32
    %c0_i32_0 = arith.constant 0 : i32
    %c0_i32_1 = arith.constant 0 : i32
    return %c0_i32, %c0_i32_0 : i32, i32
  }
  func.func @transform_3(%arg0: i32) -> (i32, i32, i32) {
    %c0_i32 = arith.constant 0 : i32
    %c0_i32_0 = arith.constant 0 : i32
    %c0_i32_1 = arith.constant 0 : i32
    return %arg0, %c0_i32, %c0_i32_0 : i32, i32, i32
  }
}

</mosaic_0001>

<llo_original>
// kernel: channel_attention.1
$region0: #{channel_attention.1}
  #allocation0 [shape = 'u32[]', space=smem, size = 0x4, offset = 0x4, fixed_abs, tag = 'smem constant byte address 0x4 - core index']
  #allocation1 [shape = 'u32[144,128]{1,0:T(1,128)}', space=vmem, size = 0x12000, scoped, tag = 'internal scratch']
  %s0 = inlined_call_operand.vmem [shape: f32[2,64,256], index: 0, kind: input, shape index: {}]
  %s1 = inlined_call_operand.vmem [shape: f32[64,4], index: 1, kind: input, shape index: {}]
  %s2 = inlined_call_operand.vmem [shape: f32[4,64], index: 2, kind: input, shape index: {}]
  %s3 = inlined_call_operand.hbm [shape: f32[2,1,64], index: 3, kind: output, shape index: {}]
  %s4 = sld [smem:[#allocation0]]
  $region45: #{channel_attention.1} parent=0
    _
  %s6 = ssub.s32 1, %s4
  %s7 = scalar_select 0, %s6, %s4
  $region1: #{channel_attention.1} parent=0
    #allocation2 [shape = 'u8[1024]{0}', space=vmem, size = 0x400, scoped, tag = 'output window, operand 0']
    #allocation3 [shape = 's32[2]{0}', space=sflag, size = 0x8, scoped, tag = 'scoped memory for channel_attention.1']
    %8 = vsyncpa [#allocation3], 0
    %s9 = scalar_lea.sflag [#allocation3], 1
    %10 = vsyncpa %s9, 0
    loop: start=0, step=1, limit=4
    $region2: #{channel_attention.1} parent=1 // loop_pre_header
      _
    $region3: #{channel_attention.1} parent=1 // loop_header
      %s12 = sphi 0, %s16
      %p13 = scmp.ge.s32.totalorder %s12, 4
      %s22 = sphi 0, %s24
      %s25 = sphi 0, %s22
      %s26 = sphi 0, %s25
      %s42 = sphi 0, %s26
      %s46 = sphi 0, %s46
      %s48 = sphi 0, %s46
      %s49 = sphi 0, %s48
      %s63 = sphi 0, %s49
      %s67 = sphi 0, %s67
      %s69 = sphi 0, %s67
      %s70 = sphi 0, %s69
      %s84 = sphi 0, %s70
      %s90 = sphi 0, %s92
      %s93 = sphi 0, %s90
      %s94 = sphi 0, %s93
      %s110 = sphi 0, %s94
    $region4: #{channel_attention.1} parent=1 // loop_header_branch
      %15 = sbr.rel (%p13) target = $region8
    $region5: #{channel_attention.1} parent=1 // loop_body
      %s17 = ssub.s32 %s12, 1
      %s18 = ssub.s32 %s12, 2
      %s19 = sadd.s32 %s12, 1
      %s20 = ssub.s32 %s12, %s19
      %p21 = scmp.eq.s32.totalorder %s20, 0
      %s23 = sadd.s32 %s22, 1
      %s24 = scalar_select %p21, %s22, %s23
      %p27 = pneg %p21
      %p28 = scmp.eq.s32.totalorder %s12, 1
      %p29 = por %p27, %p28
      %p30 = scmp.ne.s32.totalorder %s22, %s25
      %p31 = scmp.eq.s32.totalorder %s12, 0
      %p32 = por %p30, %p31
      %p33 = scmp.ne.s32.totalorder %s22, %s25
      %p34 = scmp.eq.s32.totalorder %s17, 1
      %p35 = por %p33, %p34
      %p36 = scmp.ne.s32.totalorder %s25, %s26
      %p37 = scmp.eq.s32.totalorder %s17, 0
      %p38 = por %p36, %p37
      %p39 = scmp.ne.s32.totalorder %s25, %s26
      %p40 = scmp.eq.s32.totalorder %s18, 1
      %p41 = por %p39, %p40
      %p43 = scmp.ne.s32.totalorder %s26, %s42
      %p44 = scmp.eq.s32.totalorder %s18, 0
      %p45 = por %p43, %p44
      %s47 = sadd.s32 %s46, 1
      %p50 = scmp.eq.s32.totalorder %s12, 1
      %p51 = scmp.ne.s32.totalorder %s46, %s48
      %p52 = scmp.eq.s32.totalorder %s12, 0
      %p53 = por %p51, %p52
      %p54 = scmp.ne.s32.totalorder %s46, %s48
      %p55 = scmp.eq.s32.totalorder %s17, 1
      %p56 = por %p54, %p55
      %p57 = scmp.ne.s32.totalorder %s48, %s49
      %p58 = scmp.eq.s32.totalorder %s17, 0
      %p59 = por %p57, %p58
      %p60 = scmp.ne.s32.totalorder %s48, %s49
      %p61 = scmp.eq.s32.totalorder %s18, 1
      %p62 = por %p60, %p61
      %p64 = scmp.ne.s32.totalorder %s49, %s63
      %p65 = scmp.eq.s32.totalorder %s18, 0
      %p66 = por %p64, %p65
      %s68 = sadd.s32 %s67, 1
      %p71 = scmp.eq.s32.totalorder %s12, 1
      %p72 = scmp.ne.s32.totalorder %s67, %s69
      %p73 = scmp.eq.s32.totalorder %s12, 0
      %p74 = por %p72, %p73
      %p75 = scmp.ne.s32.totalorder %s67, %s69
      %p76 = scmp.eq.s32.totalorder %s17, 1
      %p77 = por %p75, %p76
      %p78 = scmp.ne.s32.totalorder %s69, %s70
      %p79 = scmp.eq.s32.totalorder %s17, 0
      %p80 = por %p78, %p79
      %p81 = scmp.ne.s32.totalorder %s69, %s70
      %p82 = scmp.eq.s32.totalorder %s18, 1
      %p83 = por %p81, %p82
      %p85 = scmp.ne.s32.totalorder %s70, %s84
      %p86 = scmp.eq.s32.totalorder %s18, 0
      %p87 = por %p85, %p86
      %s88 = ssub.s32 %s12, %s19
      %p89 = scmp.eq.s32.totalorder %s88, 0
      %s91 = sadd.s32 %s90, 1
      %s92 = scalar_select %p89, %s90, %s91
      %p95 = pneg %p89
      %p96 = scmp.eq.s32.totalorder %s12, 1
      %p97 = por %p95, %p96
      %p98 = scmp.ne.s32.totalorder %s90, %s93
      %p99 = scmp.eq.s32.totalorder %s12, 0
      %p100 = por %p98, %p99
      %p101 = scmp.ne.s32.totalorder %s90, %s93
      %p102 = scmp.eq.s32.totalorder %s17, 1
      %p103 = por %p101, %p102
      %p104 = scmp.ne.s32.totalorder %s93, %s94
      %p105 = scmp.eq.s32.totalorder %s17, 0
      %p106 = por %p104, %p105
      %p107 = scmp.ne.s32.totalorder %s93, %s94
      %p108 = scmp.eq.s32.totalorder %s18, 1
      %p109 = por %p107, %p108
      %p111 = scmp.ne.s32.totalorder %s94, %s110
      %p112 = scmp.eq.s32.totalorder %s18, 0
      %p113 = por %p111, %p112
      %p114 = scmp.le.s32.totalorder 1, %s12
      %p115 = scmp.lt.s32.totalorder %s12, 3
      %p116 = pnand %p114, %p115
      %p117 = pneg %p116
      // Predicated region
      $region9: #{channel_attention.1} parent=5 // pred_check
        _
      $region10: #{channel_attention.1} parent=5 // pred_check_branch
        %119 = sbr.rel (%p116) target = $region12
      $region11: #{channel_attention.1} parent=5 // pred_region
        %s120 = ssub.s32 %s12, 1
        // Predicated region
        $region13: #{channel_attention.1} parent=11 // pred_check
          %p121 = pneg %p59
        $region14: #{channel_attention.1} parent=11 // pred_check_branch
          %123 = sbr.rel (%p121) target = $region16
        $region15: #{channel_attention.1} parent=11 // pred_region
          _
        $region16: #{channel_attention.1} parent=11 // pred_fallthru
          _
        // Predicated region
        $region17: #{channel_attention.1} parent=11 // pred_check
          %p124 = pneg %p80
        $region18: #{channel_attention.1} parent=11 // pred_check_branch
          %126 = sbr.rel (%p124) target = $region20
        $region19: #{channel_attention.1} parent=11 // pred_region
          _
        $region20: #{channel_attention.1} parent=11 // pred_fallthru
          _
      $region12: #{channel_attention.1} parent=5 // pred_fallthru
        _
      %p127 = scmp.lt.s32.totalorder %s12, 2
      // Predicated region
      $region21: #{channel_attention.1} parent=5 // pred_check
        %p128 = pneg %p127
      $region22: #{channel_attention.1} parent=5 // pred_check_branch
        %130 = sbr.rel (%p128) target = $region24
      $region23: #{channel_attention.1} parent=5 // pred_region
        // Predicated region
        $region25: #{channel_attention.1} parent=23 // pred_check
          %p131 = pneg %p32
        $region26: #{channel_attention.1} parent=23 // pred_check_branch
          %133 = sbr.rel (%p131) target = $region28
        $region27: #{channel_attention.1} parent=23 // pred_region
          %p134 = scmp.lt.s32.totalorder %s12, 1
          %s135 = scalar_select %p134, %s12, 1
          %s136 = smul.addr %s135, 16
          %s137 = smul.addr %s136, 8
          %s138 = scalar_lea.vmem %s0, %s137
        $region28: #{channel_attention.1} parent=23 // pred_fallthru
          _
      $region24: #{channel_attention.1} parent=5 // pred_fallthru
        _
      %p139 = scmp.le.s32.totalorder 1, %s12
      %p140 = scmp.lt.s32.totalorder %s12, 3
      %p141 = pnand %p139, %p140
      %p142 = pneg %p141
      // Predicated region
      $region29: #{channel_attention.1} parent=5 // pred_check
        _
      $region30: #{channel_attention.1} parent=5 // pred_check_branch
        %144 = sbr.rel (%p141) target = $region32
      $region31: #{channel_attention.1} parent=5 // pred_region
        %s145 = ssub.s32 %s12, 1
        %p146 = scmp.lt.s32.totalorder %s17, 1
        %s147 = scalar_select %p146, %s17, 1
        %s148 = smul.addr %s147, 16
        %s149 = smul.addr %s148, 8
        %s150 = scalar_lea.vmem %s0, %s149
        %p151 = pneg %p38
        %p152 = pneg %p35
        %p153 = pneg %p59
        %p154 = pneg %p56
        %p155 = pneg %p80
        %p156 = pneg %p77
        %p157 = pneg %p106
        %p158 = pneg %p103
        %s159 = sand.u32 %s93, 1
        %s160 = scalar_lea.sflag [#allocation3], %s159
        %s161 = sand.u32 %s93, 1
        %s162 = scalar_lea.vmem [#allocation2], %s161
        %p163 = scmp.lt.s32.totalorder %s17, 1
        %s164 = scalar_select %p163, %s17, 1
        %s165 = smul.addr %s164, 16
        %s166 = smul.addr %s165, 8
        %s167 = scalar_lea.vmem %s0, %s166
        %v168 = vld [vmem:[%s167] sm:$0xff]
        %v169 = vld [vmem:[%s167 + $0x8] sm:$0xff]
        %v170 = vld [vmem:[%s167 + $0x10] sm:$0xff]
        %v171 = vld [vmem:[%s167 + $0x18] sm:$0xff]
        %v172 = vld [vmem:[%s167 + $0x20] sm:$0xff]
        %v173 = vld [vmem:[%s167 + $0x28] sm:$0xff]
        %v174 = vld [vmem:[%s167 + $0x30] sm:$0xff]
        %v175 = vld [vmem:[%s167 + $0x38] sm:$0xff]
        %v176 = vld [vmem:[%s167 + $0x40] sm:$0xff]
        %v177 = vld [vmem:[%s167 + $0x48] sm:$0xff]
        %v178 = vld [vmem:[%s167 + $0x50] sm:$0xff]
        %v179 = vld [vmem:[%s167 + $0x58] sm:$0xff]
        %v180 = vld [vmem:[%s167 + $0x60] sm:$0xff]
        %v181 = vld [vmem:[%s167 + $0x68] sm:$0xff]
        %v182 = vld [vmem:[%s167 + $0x70] sm:$0xff]
        %v183 = vld [vmem:[%s167 + $0x78] sm:$0xff]
        %v184 = vadd.f32 %v168, %v169
        %185 = vadd.xlane.f32.xlu0 %v184
        %v186 = vpop.xlane.xlu0 %185
        %v187 = vadd.f32 %v170, %v171
        %188 = vadd.xlane.f32.xlu0 %v187
        %v189 = vpop.xlane.xlu0 %188
        %v190 = vadd.f32 %v172, %v173
        %191 = vadd.xlane.f32.xlu0 %v190
        %v192 = vpop.xlane.xlu0 %191
        %v193 = vadd.f32 %v174, %v175
        %194 = vadd.xlane.f32.xlu0 %v193
        %v195 = vpop.xlane.xlu0 %194
        %v196 = vadd.f32 %v176, %v177
        %197 = vadd.xlane.f32.xlu0 %v196
        %v198 = vpop.xlane.xlu0 %197
        %v199 = vadd.f32 %v178, %v179
        %200 = vadd.xlane.f32.xlu0 %v199
        %v201 = vpop.xlane.xlu0 %200
        %v202 = vadd.f32 %v180, %v181
        %203 = vadd.xlane.f32.xlu0 %v202
        %v204 = vpop.xlane.xlu0 %203
        %v205 = vadd.f32 %v182, %v183
        %206 = vadd.xlane.f32.xlu0 %v205
        %v207 = vpop.xlane.xlu0 %206
        %v208 = vmul.f32 %v186, 0.00390625
        %v209 = vmul.f32 %v189, 0.00390625
        %v210 = vmul.f32 %v192, 0.00390625
        %v211 = vmul.f32 %v195, 0.00390625
        %v212 = vmul.f32 %v198, 0.00390625
        %v213 = vmul.f32 %v201, 0.00390625
        %v214 = vmul.f32 %v204, 0.00390625
        %v215 = vmul.f32 %v207, 0.00390625
        %v216 = vmax.f32 %v168, %v169
        %217 = vmax.xlane.f32.xlu0 %v216
        %v218 = vpop.xlane.xlu0 %217
        %v219 = vmax.f32 %v170, %v171
        %220 = vmax.xlane.f32.xlu0 %v219
        %v221 = vpop.xlane.xlu0 %220
        %v222 = vmax.f32 %v172, %v173
        %223 = vmax.xlane.f32.xlu0 %v222
        %v224 = vpop.xlane.xlu0 %223
        %v225 = vmax.f32 %v174, %v175
        %226 = vmax.xlane.f32.xlu0 %v225
        %v227 = vpop.xlane.xlu0 %226
        %v228 = vmax.f32 %v176, %v177
        %229 = vmax.xlane.f32.xlu0 %v228
        %v230 = vpop.xlane.xlu0 %229
        %v231 = vmax.f32 %v178, %v179
        %232 = vmax.xlane.f32.xlu0 %v231
        %v233 = vpop.xlane.xlu0 %232
        %v234 = vmax.f32 %v180, %v181
        %235 = vmax.xlane.f32.xlu0 %v234
        %v236 = vpop.xlane.xlu0 %235
        %v237 = vmax.f32 %v182, %v183
        %238 = vmax.xlane.f32.xlu0 %v237
        %v239 = vpop.xlane.xlu0 %238
        %v240 = vld [vmem:[%s1] sm:$0xff]
        %v241 = vld [vmem:[%s1 + $0x8] sm:$0xff]
        %v242 = vld [vmem:[%s1 + $0x10] sm:$0xff]
        %v243 = vld [vmem:[%s1 + $0x18] sm:$0xff]
        %v244 = vld [vmem:[%s1 + $0x20] sm:$0xff]
        %v245 = vld [vmem:[%s1 + $0x28] sm:$0xff]
        %v246 = vld [vmem:[%s1 + $0x30] sm:$0xff]
        %v247 = vld [vmem:[%s1 + $0x38] sm:$0xff]
        %v256 = vlaneseq
        %v257 = vand.u32 %v256, 127
        %v258 = vlaneseq
        %v259 = vshrl.u32 %v258, 7
        %v260 = vsub.s32 %v257, %v259
        %v261 = vrot.slane %v208, %v260
        %v262 = vadd.s32 %v257, 4294967288
        %v263 = vlaneseq
        %v264 = vshrl.u32 %v263, 7
        %v265 = vsub.s32 %v262, %v264
        %v266 = vrot.slane %v209, %v265
        %vm267 = vcmask 130112
        %v268 = vsel %vm267, %v266, %v261
        %v269 = vadd.s32 %v257, 4294967280
        %v270 = vlaneseq
        %v271 = vshrl.u32 %v270, 7
        %v272 = vsub.s32 %v269, %v271
        %v273 = vrot.slane %v210, %v272
        %vm274 = vcmask 195712
        %v275 = vsel %vm274, %v273, %v268
        %v276 = vadd.s32 %v257, 4294967272
        %v277 = vlaneseq
        %v278 = vshrl.u32 %v277, 7
        %v279 = vsub.s32 %v276, %v278
        %v280 = vrot.slane %v211, %v279
        %vm281 = vcmask 261312
        %v282 = vsel %vm281, %v280, %v275
        %v283 = vadd.s32 %v257, 4294967264
        %v284 = vlaneseq
        %v285 = vshrl.u32 %v284, 7
        %v286 = vsub.s32 %v283, %v285
        %v287 = vrot.slane %v212, %v286
        %vm288 = vcmask 326912
        %v289 = vsel %vm288, %v287, %v282
        %v290 = vadd.s32 %v257, 4294967256
        %v291 = vlaneseq
        %v292 = vshrl.u32 %v291, 7
        %v293 = vsub.s32 %v290, %v292
        %v294 = vrot.slane %v213, %v293
        %vm295 = vcmask 392512
        %v296 = vsel %vm295, %v294, %v289
        %v297 = vadd.s32 %v257, 4294967248
        %v298 = vlaneseq
        %v299 = vshrl.u32 %v298, 7
        %v300 = vsub.s32 %v297, %v299
        %v301 = vrot.slane %v214, %v300
        %vm302 = vcmask 458112
        %v303 = vsel %vm302, %v301, %v296
        %v304 = vadd.s32 %v257, 4294967240
        %v305 = vlaneseq
        %v306 = vshrl.u32 %v305, 7
        %v307 = vsub.s32 %v304, %v306
        %v308 = vrot.slane %v215, %v307
        %vm309 = vcmask 523712
        %v310 = vsel %vm309, %v308, %v303
        %vm311 = vcmask 523264
        %v312 = vsel %vm311, %v310, 0
        %314 = vmatprep.subr.mxu0 0.0
        %315 = vmatpush1.msra.mxu0 0.0
        %316 = vmatprep.subr.mxu0 0.0
        %317 = vmatpush1.msra.mxu0 0.0
        %318 = vmatprep.subr.mxu0 0.0
        %319 = vmatpush1.msra.mxu0 0.0
        %320 = vmatprep.subr.mxu0 0.0
        %321 = vmatpush1.msra.mxu0 0.0
        %322 = vmatprep.subr.mxu0 0.0
        %323 = vmatpush1.msra.mxu0 0.0
        %324 = vmatprep.subr.mxu0 0.0
        %325 = vmatpush1.msra.mxu0 0.0
        %326 = vmatprep.subr.mxu0 0.0
        %327 = vmatpush1.msra.mxu0 0.0
        %328 = vmatprep.subr.mxu0 0.0
        %329 = vmatpush1.msra.mxu0 0.0
        %330 = vmatprep.subr.mxu0 0.0
        %331 = vmatpush1.msra.mxu0 %v247
        %332 = vmatprep.subr.mxu0 0.0
        %333 = vmatpush1.msra.mxu0 %v246
        %334 = vmatprep.subr.mxu0 0.0
        %335 = vmatpush1.msra.mxu0 %v245
        %336 = vmatprep.subr.mxu0 0.0
        %337 = vmatpush1.msra.mxu0 %v244
        %338 = vmatprep.subr.mxu0 0.0
        %339 = vmatpush1.msra.mxu0 %v243
        %340 = vmatprep.subr.mxu0 0.0
        %341 = vmatpush1.msra.mxu0 %v242
        %342 = vmatprep.subr.mxu0 0.0
        %343 = vmatpush1.msra.mxu0 %v241
        %344 = vmatprep.subr.mxu0 0.0
        %345 = vmatpush1.msra.mxu0 %v240
        %346 = vmatprep.subr.mxu0 0.0
        %347 = vmatpush2.msra.mxu0 0.0
        %348 = vmatprep.subr.mxu0 0.0
        %349 = vmatpush2.msra.mxu0 0.0
        %350 = vmatprep.subr.mxu0 0.0
        %351 = vmatpush2.msra.mxu0 0.0
        %352 = vmatprep.subr.mxu0 0.0
        %353 = vmatpush2.msra.mxu0 0.0
        %354 = vmatprep.subr.mxu0 0.0
        %355 = vmatpush2.msra.mxu0 0.0
        %356 = vmatprep.subr.mxu0 0.0
        %357 = vmatpush2.msra.mxu0 0.0
        %358 = vmatprep.subr.mxu0 0.0
        %359 = vmatpush2.msra.mxu0 0.0
        %360 = vmatprep.subr.mxu0 0.0
        %361 = vmatpush2.msra.mxu0 0.0
        %362 = vmatprep.subr.mxu0 0.0
        %363 = vmatpush2.msra.mxu0 0.0
        %364 = vmatprep.subr.mxu0 0.0
        %365 = vmatpush2.msra.mxu0 0.0
        %366 = vmatprep.subr.mxu0 0.0
        %367 = vmatpush2.msra.mxu0 0.0
        %368 = vmatprep.subr.mxu0 0.0
        %369 = vmatpush2.msra.mxu0 0.0
        %370 = vmatprep.subr.mxu0 0.0
        %371 = vmatpush2.msra.mxu0 0.0
        %372 = vmatprep.subr.mxu0 0.0
        %373 = vmatpush2.msra.mxu0 0.0
        %374 = vmatprep.subr.mxu0 0.0
        %375 = vmatpush2.msra.mxu0 0.0
        %376 = vmatprep.subr.mxu0 0.0
        %377 = vmatpush2.msra.mxu0 0.0
        %378 = vmatprep.mubr.f32.mxu0 0.0
        %379 = vmatmul.mubr.f32.gmra.mxu0 %v312
        %v380 = vpop.f32.mrf.mxu0
        %v381 = vadd.f32 0.0, %v380
        %v382 = vpop.f32.mrf.mxu0
        %383 = vdwg.mxu0
        %v384 = vmax.f32 %v381, 0.0
        %v393 = vlaneseq
        %v394 = vshrl.u32 %v393, 7
        %v395 = vsub.s32 %v257, %v394
        %v396 = vrot.slane %v218, %v395
        %v397 = vlaneseq
        %v398 = vshrl.u32 %v397, 7
        %v399 = vsub.s32 %v262, %v398
        %v400 = vrot.slane %v221, %v399
        %v401 = vsel %vm267, %v400, %v396
        %v402 = vlaneseq
        %v403 = vshrl.u32 %v402, 7
        %v404 = vsub.s32 %v269, %v403
        %v405 = vrot.slane %v224, %v404
        %v406 = vsel %vm274, %v405, %v401
        %v407 = vlaneseq
        %v408 = vshrl.u32 %v407, 7
        %v409 = vsub.s32 %v276, %v408
        %v410 = vrot.slane %v227, %v409
        %v411 = vsel %vm281, %v410, %v406
        %v412 = vlaneseq
        %v413 = vshrl.u32 %v412, 7
        %v414 = vsub.s32 %v283, %v413
        %v415 = vrot.slane %v230, %v414
        %v416 = vsel %vm288, %v415, %v411
        %v417 = vlaneseq
        %v418 = vshrl.u32 %v417, 7
        %v419 = vsub.s32 %v290, %v418
        %v420 = vrot.slane %v233, %v419
        %v421 = vsel %vm295, %v420, %v416
        %v422 = vlaneseq
        %v423 = vshrl.u32 %v422, 7
        %v424 = vsub.s32 %v297, %v423
        %v425 = vrot.slane %v236, %v424
        %v426 = vsel %vm302, %v425, %v421
        %v427 = vlaneseq
        %v428 = vshrl.u32 %v427, 7
        %v429 = vsub.s32 %v304, %v428
        %v430 = vrot.slane %v239, %v429
        %v431 = vsel %vm309, %v430, %v426
        %v432 = vsel %vm311, %v431, 0
        %434 = vmatprep.subr.mxu0 0.0
        %435 = vmatpush1.msra.mxu0 0.0
        %436 = vmatprep.subr.mxu0 0.0
        %437 = vmatpush1.msra.mxu0 0.0
        %438 = vmatprep.subr.mxu0 0.0
        %439 = vmatpush1.msra.mxu0 0.0
        %440 = vmatprep.subr.mxu0 0.0
        %441 = vmatpush1.msra.mxu0 0.0
        %442 = vmatprep.subr.mxu0 0.0
        %443 = vmatpush1.msra.mxu0 0.0
        %444 = vmatprep.subr.mxu0 0.0
        %445 = vmatpush1.msra.mxu0 0.0
        %446 = vmatprep.subr.mxu0 0.0
        %447 = vmatpush1.msra.mxu0 0.0
        %448 = vmatprep.subr.mxu0 0.0
        %449 = vmatpush1.msra.mxu0 0.0
        %450 = vmatprep.subr.mxu0 0.0
        %451 = vmatpush1.msra.mxu0 %v247
        %452 = vmatprep.subr.mxu0 0.0
        %453 = vmatpush1.msra.mxu0 %v246
        %454 = vmatprep.subr.mxu0 0.0
        %455 = vmatpush1.msra.mxu0 %v245
        %456 = vmatprep.subr.mxu0 0.0
        %457 = vmatpush1.msra.mxu0 %v244
        %458 = vmatprep.subr.mxu0 0.0
        %459 = vmatpush1.msra.mxu0 %v243
        %460 = vmatprep.subr.mxu0 0.0
        %461 = vmatpush1.msra.mxu0 %v242
        %462 = vmatprep.subr.mxu0 0.0
        %463 = vmatpush1.msra.mxu0 %v241
        %464 = vmatprep.subr.mxu0 0.0
        %465 = vmatpush1.msra.mxu0 %v240
        %466 = vmatprep.subr.mxu0 0.0
        %467 = vmatpush2.msra.mxu0 0.0
        %468 = vmatprep.subr.mxu0 0.0
        %469 = vmatpush2.msra.mxu0 0.0
        %470 = vmatprep.subr.mxu0 0.0
        %471 = vmatpush2.msra.mxu0 0.0
        %472 = vmatprep.subr.mxu0 0.0
        %473 = vmatpush2.msra.mxu0 0.0
        %474 = vmatprep.subr.mxu0 0.0
        %475 = vmatpush2.msra.mxu0 0.0
        %476 = vmatprep.subr.mxu0 0.0
        %477 = vmatpush2.msra.mxu0 0.0
        %478 = vmatprep.subr.mxu0 0.0
        %479 = vmatpush2.msra.mxu0 0.0
        %480 = vmatprep.subr.mxu0 0.0
        %481 = vmatpush2.msra.mxu0 0.0
        %482 = vmatprep.subr.mxu0 0.0
        %483 = vmatpush2.msra.mxu0 0.0
        %484 = vmatprep.subr.mxu0 0.0
        %485 = vmatpush2.msra.mxu0 0.0
        %486 = vmatprep.subr.mxu0 0.0
        %487 = vmatpush2.msra.mxu0 0.0
        %488 = vmatprep.subr.mxu0 0.0
        %489 = vmatpush2.msra.mxu0 0.0
        %490 = vmatprep.subr.mxu0 0.0
        %491 = vmatpush2.msra.mxu0 0.0
        %492 = vmatprep.subr.mxu0 0.0
        %493 = vmatpush2.msra.mxu0 0.0
        %494 = vmatprep.subr.mxu0 0.0
        %495 = vmatpush2.msra.mxu0 0.0
        %496 = vmatprep.subr.mxu0 0.0
        %497 = vmatpush2.msra.mxu0 0.0
        %498 = vmatprep.mubr.f32.mxu0 0.0
        %499 = vmatmul.mubr.f32.gmra.mxu0 %v432
        %v500 = vpop.f32.mrf.mxu0
        %v501 = vadd.f32 0.0, %v500
        %v502 = vpop.f32.mrf.mxu0
        %503 = vdwg.mxu0
        %v504 = vmax.f32 %v501, 0.0
        %v505 = vadd.f32 %v384, %v504
        %v506 = vld [vmem:[%s2] sm:$0xf]
        %vm507 = vcmask 31744
        %v509 = vsel %vm507, %v505, 0
        %vm511 = vcmask 1043456
        %v513 = vsel %vm511, %v506, 0
        %515 = vmatprep.subr.mxu0 0.0
        %516 = vmatpush1.msra.mxu0 0.0
        %517 = vmatprep.subr.mxu0 0.0
        %518 = vmatpush1.msra.mxu0 0.0
        %519 = vmatprep.subr.mxu0 0.0
        %520 = vmatpush1.msra.mxu0 0.0
        %521 = vmatprep.subr.mxu0 0.0
        %522 = vmatpush1.msra.mxu0 0.0
        %523 = vmatprep.subr.mxu0 0.0
        %524 = vmatpush1.msra.mxu0 0.0
        %525 = vmatprep.subr.mxu0 0.0
        %526 = vmatpush1.msra.mxu0 0.0
        %527 = vmatprep.subr.mxu0 0.0
        %528 = vmatpush1.msra.mxu0 0.0
        %529 = vmatprep.subr.mxu0 0.0
        %530 = vmatpush1.msra.mxu0 0.0
        %531 = vmatprep.subr.mxu0 0.0
        %532 = vmatpush1.msra.mxu0 0.0
        %533 = vmatprep.subr.mxu0 0.0
        %534 = vmatpush1.msra.mxu0 0.0
        %535 = vmatprep.subr.mxu0 0.0
        %536 = vmatpush1.msra.mxu0 0.0
        %537 = vmatprep.subr.mxu0 0.0
        %538 = vmatpush1.msra.mxu0 0.0
        %539 = vmatprep.subr.mxu0 0.0
        %540 = vmatpush1.msra.mxu0 0.0
        %541 = vmatprep.subr.mxu0 0.0
        %542 = vmatpush1.msra.mxu0 0.0
        %543 = vmatprep.subr.mxu0 0.0
        %544 = vmatpush1.msra.mxu0 0.0
        %545 = vmatprep.subr.mxu0 0.0
        %546 = vmatpush1.msra.mxu0 %v513
        %547 = vmatprep.subr.mxu0 0.0
        %548 = vmatpush2.msra.mxu0 0.0
        %549 = vmatprep.subr.mxu0 0.0
        %550 = vmatpush2.msra.mxu0 0.0
        %551 = vmatprep.subr.mxu0 0.0
        %552 = vmatpush2.msra.mxu0 0.0
        %553 = vmatprep.subr.mxu0 0.0
        %554 = vmatpush2.msra.mxu0 0.0
        %555 = vmatprep.subr.mxu0 0.0
        %556 = vmatpush2.msra.mxu0 0.0
        %557 = vmatprep.subr.mxu0 0.0
        %558 = vmatpush2.msra.mxu0 0.0
        %559 = vmatprep.subr.mxu0 0.0
        %560 = vmatpush2.msra.mxu0 0.0
        %561 = vmatprep.subr.mxu0 0.0
        %562 = vmatpush2.msra.mxu0 0.0
        %563 = vmatprep.subr.mxu0 0.0
        %564 = vmatpush2.msra.mxu0 0.0
        %565 = vmatprep.subr.mxu0 0.0
        %566 = vmatpush2.msra.mxu0 0.0
        %567 = vmatprep.subr.mxu0 0.0
        %568 = vmatpush2.msra.mxu0 0.0
        %569 = vmatprep.subr.mxu0 0.0
        %570 = vmatpush2.msra.mxu0 0.0
        %571 = vmatprep.subr.mxu0 0.0
        %572 = vmatpush2.msra.mxu0 0.0
        %573 = vmatprep.subr.mxu0 0.0
        %574 = vmatpush2.msra.mxu0 0.0
        %575 = vmatprep.subr.mxu0 0.0
        %576 = vmatpush2.msra.mxu0 0.0
        %577 = vmatprep.subr.mxu0 0.0
        %578 = vmatpush2.msra.mxu0 0.0
        %579 = vmatprep.mubr.f32.mxu0 0.0
        %580 = vmatmul.mubr.f32.gmra.mxu0 %v509
        %v581 = vpop.f32.mrf.mxu0
        %v582 = vadd.f32 0.0, %v581
        %v583 = vpop.f32.mrf.mxu0
        %584 = vdwg.mxu0
        %v585 = vxor.u32 %v582, 2147483648
        %v586 = vmul.f32 %v585, 1.442695
        %v587 = vpow.pop %v586
        %v588 = vadd.f32 %v587, 1.0
        %v589 = vrcp.pop %v588
        %v590 = vmul.f32 1.0, %v589
        %vm591 = vcmask 516096
        %592 = vst.msk [vmem:[%s162] sm:$0x1] %vm591, %v590
        %s593 = sand.u32 %s93, 1
        %s594 = scalar_lea.sflag [#allocation3], %s593
        %s595 = sand.u32 %s93, 1
        %s596 = scalar_lea.vmem [#allocation2], %s595
        // Predicated region
        $region33: #{channel_attention.1} parent=31 // pred_check
          %p597 = pneg %p103
        $region34: #{channel_attention.1} parent=31 // pred_check_branch
          %599 = sbr.rel (%p597) target = $region36
        $region35: #{channel_attention.1} parent=31 // pred_region
          %s601 = ssub.s32 16, 16
          %602 = vsyncadd %s594, %s601
          %s603 = smul.addr %s17, 16
          %s604 = scalar_lea.hbm %s3, %s603
          %s606 = sshll.u32 %s596, 4
          %s607 = int_to_ptr.vmem [resolvable:$true] %s606
          %609 = dma.vmem_to_hbm [thread:$0]  %s607, 16, %s604, %s594
        $region36: #{channel_attention.1} parent=31 // pred_fallthru
          _
      $region32: #{channel_attention.1} parent=5 // pred_fallthru
        _
      %p610 = scmp.le.s32.totalorder 2, %s12
      // Predicated region
      $region37: #{channel_attention.1} parent=5 // pred_check
        %p611 = pneg %p610
      $region38: #{channel_attention.1} parent=5 // pred_check_branch
        %613 = sbr.rel (%p611) target = $region40
      $region39: #{channel_attention.1} parent=5 // pred_region
        %s614 = ssub.s32 %s12, 2
        // Predicated region
        $region41: #{channel_attention.1} parent=39 // pred_check
          %p615 = pneg %p109
        $region42: #{channel_attention.1} parent=39 // pred_check_branch
          %617 = sbr.rel (%p615) target = $region44
        $region43: #{channel_attention.1} parent=39 // pred_region
          %s618 = sand.u32 %s94, 1
          %s619 = scalar_lea.sflag [#allocation3], %s618
          %s620 = sand.u32 %s94, 1
          %s621 = scalar_lea.vmem [#allocation2], %s620
          %622 = dma.done %s619, 16
        $region44: #{channel_attention.1} parent=39 // pred_fallthru
          _
      $region40: #{channel_attention.1} parent=5 // pred_fallthru
        _
    $region6: #{channel_attention.1} parent=1 // loop_footer
      %s16 = sadd.s32 1, %s12
    $region7: #{channel_attention.1} parent=1 // loop_footer_branch
      %11 = sbr.rel target = $region3
    $region8: #{channel_attention.1} parent=1 // loop_exit
      _
    %623 = vsyncpa [#allocation3], 1
    %s624 = scalar_lea.sflag [#allocation3], 1
    %625 = vsyncpa %s624, 1

</llo_original>
